<compile_context>
chip_gen: v5e
topology: v5e:2x2
jax: 0.10.0
libtpu: 0.0.40
codegen_flags: <defaults>
</compile_context>

<pallas_src>
import functools

import jax
import jax.numpy as jnp
from jax.experimental import pallas as pl
from jax.experimental.pallas import tpu as pltpu


def _round_up(x, m):
    return ((x + m - 1) // m) * m


def _vmem_plan():
    """(vmem_limit_bytes, working_set_budget, force_multi_step) per TPU gen.

    v7x-class parts: 64 MiB VMEM / TensorCore, two TensorCores -> smaller
    budget and keep >=2 grid steps so the 'parallel' axis shards across both.
    v5e / v6e: 128 MiB VMEM, single TensorCore -> bigger blocks are pure win.
    Unknown hardware (or interpret mode) falls back to the conservative plan.
    """
    cap = 0
    try:
        cap = int(getattr(pltpu.get_tpu_info(), "vmem_capacity_bytes", 0))
    except Exception:
        cap = 0
    if cap > (64 << 20):                      # v5e / v6e class
        return 96 << 20, 80 << 20, False
    return 48 << 20, 40 << 20, True           # v7x class (or unknown)


def _auto_row_tile(n_rows, lane_width, in_itemsize, ws_budget, force_multi_step):
    """Rows per block: as big as the double-buffered VMEM budget allows."""
    sub = 16 if in_itemsize < 4 else 8         # sublane packing (bf16 vs f32)
    padded_w = _round_up(lane_width, 128)      # VMEM lane padding
    # 3 double-buffered input streams + 1 double-buffered f32 output block
    # (output is lane-padded to 128 in VMEM regardless of its logical width).
    per_row = 2 * (3 * padded_w * in_itemsize + 128 * 4)
    tile = max(sub, (ws_budget // per_row) // sub * sub)
    if force_multi_step and n_rows > sub:
        # Keep >= 2 grid steps so megacore (v7x) can split the edge axis.
        tile = min(tile, max(sub, _round_up(pl.cdiv(n_rows, 2), sub)))
    return int(tile)


def _clamp_tile(tile, n_rows, in_itemsize):
    sub = 16 if in_itemsize < 4 else 8
    tile = _round_up(int(tile), sub)
    if tile >= n_rows:
        return n_rows            # single full-extent block (always legal)
    return tile                  # multiple-of-sublane block, ragged last step


def _distmult_folded_kernel(h_ref, r_ref, t_ref, o_ref, *, fold, d):
    # h/r/t: (T, 128) blocks, each row packing `fold` edges of width d.
    # o: (T, fold); o[i, g] = score of edge (row i, group g).
    p = (h_ref[...].astype(jnp.float32)
         * r_ref[...].astype(jnp.float32)
         * t_ref[...].astype(jnp.float32))
    cols = [jnp.sum(p[:, g * d:(g + 1) * d], axis=-1, keepdims=True)
            for g in range(fold)]
    o_ref[...] = jnp.concatenate(cols, axis=-1) if fold > 1 else cols[0]


def _distmult_rowwise_kernel(h_ref, r_ref, t_ref, o_ref):
    # h/r/t: (T, D); o: (T, 1).  Fallback when D is not a divisor of 128.
    p = (h_ref[...].astype(jnp.float32)
         * r_ref[...].astype(jnp.float32)
         * t_ref[...].astype(jnp.float32))
    o_ref[...] = jnp.sum(p, axis=-1, keepdims=True)


def distmult_score(head, rel, tail, *, row_tile=None):
    """DistMult edge scores for E edges.  head/rel/tail: (E, D) -> (E,) f32.

    Feeding bf16 embeddings halves HBM traffic (accumulation is f32 on-chip);
    if embeddings live in f32, cast them once where they are stored.
    """
    E, D = head.shape
    assert rel.shape == (E, D) and tail.shape == (E, D)

    vmem_limit, ws_budget, multi_step = _vmem_plan()
    itemsize = jnp.dtype(head.dtype).itemsize
    cparams = pltpu.CompilerParams(
        dimension_semantics=("parallel",),
        vmem_limit_bytes=vmem_limit,
    )

    fold = 128 // D if (0 < D <= 128 and 128 % D == 0) else 0
    if fold >= 1 and (E * D) % 128 == 0:
        # Lane-folded path: (E, D) viewed as (E*D/128, 128), fully lane-dense.
        ef = (E * D) // 128
        h2, r2, t2 = (x.reshape(ef, 128) for x in (head, rel, tail))
        tile = row_tile if row_tile is not None else _auto_row_tile(
            ef, 128, itemsize, ws_budget, multi_step)
        tile = _clamp_tile(tile, ef, itemsize)
        kernel = functools.partial(_distmult_folded_kernel, fold=fold, d=D)
        out = pl.pallas_call(
            kernel,
            out_shape=jax.ShapeDtypeStruct((ef, fold), jnp.float32),
            grid_spec=pltpu.PrefetchScalarGridSpec(
                num_scalar_prefetch=0,
                grid=(pl.cdiv(ef, tile),),
                in_specs=[pl.BlockSpec((tile, 128), lambda i: (i, 0))] * 3,
                out_specs=pl.BlockSpec((tile, fold), lambda i: (i, 0)),
            ),
            compiler_params=cparams,
        )(h2, r2, t2)
        return out.reshape(E)

    # Fallback: feature dim stays in lanes (lane-padded when D % 128 != 0).
    # No host-side padding; the last grid step is a ragged boundary block.
    # TODO(synk): for real embedding dims like 400, pad D to a multiple of 128
    # once at embedding-table creation so this path is lane-dense too.
    tile = row_tile if row_tile is not None else _auto_row_tile(
        E, D, itemsize, ws_budget, multi_step)
    tile = _clamp_tile(tile, E, itemsize)
    out = pl.pallas_call(
        _distmult_rowwise_kernel,
        out_shape=jax.ShapeDtypeStruct((E, 1), jnp.float32),
        grid_spec=pltpu.PrefetchScalarGridSpec(
            num_scalar_prefetch=0,
            grid=(pl.cdiv(E, tile),),
            in_specs=[pl.BlockSpec((tile, D), lambda i: (i, 0))] * 3,
            out_specs=pl.BlockSpec((tile, 1), lambda i: (i, 0)),
        ),
        compiler_params=cparams,
    )(head, rel, tail)
    return out.reshape(E)


def distmult_score_ref(head, rel, tail):
    return jnp.sum(head.astype(jnp.float32)
                   * rel.astype(jnp.float32)
                   * tail.astype(jnp.float32), axis=-1)


# TODO(synk): infer / create_neg paths (chunked negative-sample bmm) are plain
# dense matmuls; they are left to XLA (jnp.einsum) rather than kernelized here.


if __name__ == "__main__":
    key = jax.random.PRNGKey(0)

    def check(E, D, dtype, row_tile=None):
        ks = jax.random.split(jax.random.fold_in(key, E * 1000 + D), 3)
        h = jax.random.normal(ks[0], (E, D), dtype=jnp.float32).astype(dtype)
        r = jax.random.normal(ks[1], (E, D), dtype=jnp.float32).astype(dtype)
        t = jax.random.normal(ks[2], (E, D), dtype=jnp.float32).astype(dtype)
        s = jax.block_until_ready(distmult_score(h, r, t, row_tile=row_tile))
        ref = distmult_score_ref(h, r, t)
        assert s.shape == (E,), (s.shape, E)
        assert jnp.allclose(s, ref, atol=2e-3, rtol=2e-3), (E, D, str(dtype))

    # Folded path (D=32 -> 4 edges per 128-lane row), auto-sized tile.
    check(100, 32, jnp.float32)
    # Folded path with a forced small tile -> exercises ragged last grid step.
    check(100, 32, jnp.float32, row_tile=8)
    # bf16 inputs (half the HBM traffic; f32 accumulation in-kernel).
    check(100, 32, jnp.bfloat16)
    # Fallback row-wise path (D not a divisor of 128), ragged blocks.
    check(70, 48, jnp.float32, row_tile=16)

    print("KERNEL_OK")
</pallas_src>

<mosaic_0001>
module attributes {stable_mosaic.version = 11 : i64} {
  func.func @_distmult_folded_kernel(%arg0: i32, %arg1: memref<16x128xf32, #tpu.memory_space<vmem>>, %arg2: memref<16x128xf32, #tpu.memory_space<vmem>>, %arg3: memref<16x128xf32, #tpu.memory_space<vmem>>, %arg4: memref<16x4xf32, #tpu.memory_space<vmem>>) attributes {dimension_semantics = [#tpu.dimension_semantics<parallel>], iteration_bounds = array<i64: 2>, scalar_prefetch = 0 : i64, scratch_operands = 0 : i64, tpu.core_type = #tpu.core_type<tc>, window_params = [{transform_indices = @transform_0, window_bounds = array<i64: 16, 128>}, {transform_indices = @transform_1, window_bounds = array<i64: 16, 128>}, {transform_indices = @transform_2, window_bounds = array<i64: 16, 128>}, {transform_indices = @transform_3, window_bounds = array<i64: 16, 4>}]} {
    %c0 = arith.constant 0 : index
    %c0_0 = arith.constant 0 : index
    %0 = vector.load %arg1[%c0, %c0_0] : memref<16x128xf32, #tpu.memory_space<vmem>>, vector<16x128xf32>
    %c0_1 = arith.constant 0 : index
    %c0_2 = arith.constant 0 : index
    %1 = vector.load %arg2[%c0_1, %c0_2] : memref<16x128xf32, #tpu.memory_space<vmem>>, vector<16x128xf32>
    %2 = arith.mulf %0, %1 : vector<16x128xf32>
    %c0_3 = arith.constant 0 : index
    %c0_4 = arith.constant 0 : index
    %3 = vector.load %arg3[%c0_3, %c0_4] : memref<16x128xf32, #tpu.memory_space<vmem>>, vector<16x128xf32>
    %4 = arith.mulf %2, %3 : vector<16x128xf32>
    %5 = vector.extract_strided_slice %4 {offsets = [0, 0], sizes = [16, 32], strides = [1, 1]} : vector<16x128xf32> to vector<16x32xf32>
    %cst = arith.constant dense<0.000000e+00> : vector<16xf32>
    %6 = vector.multi_reduction <add>, %5, %cst [1] : vector<16x32xf32> to vector<16xf32>
    %7 = vector.shape_cast %6 : vector<16xf32> to vector<16x1xf32>
    %8 = vector.extract_strided_slice %4 {offsets = [0, 32], sizes = [16, 32], strides = [1, 1]} : vector<16x128xf32> to vector<16x32xf32>
    %cst_5 = arith.constant dense<0.000000e+00> : vector<16xf32>
    %9 = vector.multi_reduction <add>, %8, %cst_5 [1] : vector<16x32xf32> to vector<16xf32>
    %10 = vector.shape_cast %9 : vector<16xf32> to vector<16x1xf32>
    %11 = vector.extract_strided_slice %4 {offsets = [0, 64], sizes = [16, 32], strides = [1, 1]} : vector<16x128xf32> to vector<16x32xf32>
    %cst_6 = arith.constant dense<0.000000e+00> : vector<16xf32>
    %12 = vector.multi_reduction <add>, %11, %cst_6 [1] : vector<16x32xf32> to vector<16xf32>
    %13 = vector.shape_cast %12 : vector<16xf32> to vector<16x1xf32>
    %14 = vector.extract_strided_slice %4 {offsets = [0, 96], sizes = [16, 32], strides = [1, 1]} : vector<16x128xf32> to vector<16x32xf32>
    %cst_7 = arith.constant dense<0.000000e+00> : vector<16xf32>
    %15 = vector.multi_reduction <add>, %14, %cst_7 [1] : vector<16x32xf32> to vector<16xf32>
    %16 = vector.shape_cast %15 : vector<16xf32> to vector<16x1xf32>
    %17 = tpu.concatenate %7, %10, %13, %16 in 1 : vector<16x1xf32>, vector<16x1xf32>, vector<16x1xf32>, vector<16x1xf32> -> vector<16x4xf32>
    %c0_8 = arith.constant 0 : index
    %c0_9 = arith.constant 0 : index
    %18 = vector.load %arg4[%c0_8, %c0_9] : memref<16x4xf32, #tpu.memory_space<vmem>>, vector<16x4xf32>
    tpu.vector_store %arg4[%c0_8, %c0_9], %17 {strides = array<i32>} : memref<16x4xf32, #tpu.memory_space<vmem>>, vector<16x4xf32>,
    return
  }
  func.func @transform_0(%arg0: i32) -> (i32, i32) {
    %c0_i32 = arith.constant 0 : i32
    %c0_i32_0 = arith.constant 0 : i32
    return %arg0, %c0_i32 : i32, i32
  }
  func.func @transform_1(%arg0: i32) -> (i32, i32) {
    %c0_i32 = arith.constant 0 : i32
    %c0_i32_0 = arith.constant 0 : i32
    return %arg0, %c0_i32 : i32, i32
  }
  func.func @transform_2(%arg0: i32) -> (i32, i32) {
    %c0_i32 = arith.constant 0 : i32
    %c0_i32_0 = arith.constant 0 : i32
    return %arg0, %c0_i32 : i32, i32
  }
  func.func @transform_3(%arg0: i32) -> (i32, i32) {
    %c0_i32 = arith.constant 0 : i32
    %c0_i32_0 = arith.constant 0 : i32
    return %arg0, %c0_i32 : i32, i32
  }
}

</mosaic_0001>

<llo_original>
// kernel: tpu_custom_call.1
$region0: #{tpu_custom_call.1}
  #allocation0 [shape = 'u32[]', space=smem, size = 0x4, offset = 0x4, fixed_abs, tag = 'smem constant byte address 0x4 - core index']
  #allocation1 [shape = 'u32[72,128]{1,0:T(1,128)}', space=vmem, size = 0x9000, scoped, tag = 'internal scratch']
  %s0 = inlined_call_operand.hbm [shape: f32[25,128], index: 0, kind: input, shape index: {}]
  %s1 = inlined_call_operand.hbm [shape: f32[25,128], index: 1, kind: input, shape index: {}]
  %s2 = inlined_call_operand.hbm [shape: f32[25,128], index: 2, kind: input, shape index: {}]
  %s3 = inlined_call_operand.vmem [shape: f32[25,4], index: 3, kind: output, shape index: {}]
  %s4 = sld [smem:[#allocation0]]
  $region57: #{tpu_custom_call.1} parent=0
    _
  %s6 = ssub.s32 1, %s4
  %s7 = scalar_select 0, %s6, %s4
  $region1: #{tpu_custom_call.1} parent=0
    #allocation2 [shape = 'u8[16384]{0}', space=vmem, size = 0x4000, scoped, tag = 'input window, operand 0']
    #allocation3 [shape = 's32[2]{0}', space=sflag, size = 0x8, scoped, tag = 'scoped memory for tpu_custom_call.1']
    #allocation4 [shape = 'u8[16384]{0}', space=vmem, size = 0x4000, scoped, tag = 'input window, operand 1']
    #allocation5 [shape = 's32[2]{0}', space=sflag, size = 0x8, scoped, tag = 'scoped memory for tpu_custom_call.1']
    #allocation6 [shape = 'u8[16384]{0}', space=vmem, size = 0x4000, scoped, tag = 'input window, operand 2']
    %8 = vsyncpa [#allocation3], 0
    %s9 = scalar_lea.sflag [#allocation3], 1
    %10 = vsyncpa %s9, 0
    %11 = vsyncpa [#allocation5], 0
    %s12 = scalar_lea.sflag [#allocation5], 1
    %13 = vsyncpa %s12, 0
    loop: start=0, step=1, limit=4
    $region2: #{tpu_custom_call.1} parent=1 // loop_pre_header
      _
    $region3: #{tpu_custom_call.1} parent=1 // loop_header
      %s15 = sphi 0, %s19
      %p16 = scmp.ge.s32.totalorder %s15, 4
      %s25 = sphi 0, %s27
      %s28 = sphi 0, %s25
      %s29 = sphi 0, %s28
      %s45 = sphi 0, %s29
      %s51 = sphi 0, %s53
      %s54 = sphi 0, %s51
      %s55 = sphi 0, %s54
      %s71 = sphi 0, %s55
      %s77 = sphi 0, %s79
      %s80 = sphi 0, %s77
      %s81 = sphi 0, %s80
      %s97 = sphi 0, %s81
      %s103 = sphi 0, %s105
      %s106 = sphi 0, %s103
      %s107 = sphi 0, %s106
      %s123 = sphi 0, %s107
    $region4: #{tpu_custom_call.1} parent=1 // loop_header_branch
      %18 = sbr.rel (%p16) target = $region8
    $region5: #{tpu_custom_call.1} parent=1 // loop_body
      %s20 = ssub.s32 %s15, 1
      %s21 = ssub.s32 %s15, 2
      %s22 = sadd.s32 %s15, 1
      %s23 = ssub.s32 %s15, %s22
      %p24 = scmp.eq.s32.totalorder %s23, 0
      %s26 = sadd.s32 %s25, 1
      %s27 = scalar_select %p24, %s25, %s26
      %p30 = pneg %p24
      %p31 = scmp.eq.s32.totalorder %s15, 1
      %p32 = por %p30, %p31
      %p33 = scmp.ne.s32.totalorder %s25, %s28
      %p34 = scmp.eq.s32.totalorder %s15, 0
      %p35 = por %p33, %p34
      %p36 = scmp.ne.s32.totalorder %s25, %s28
      %p37 = scmp.eq.s32.totalorder %s20, 1
      %p38 = por %p36, %p37
      %p39 = scmp.ne.s32.totalorder %s28, %s29
      %p40 = scmp.eq.s32.totalorder %s20, 0
      %p41 = por %p39, %p40
      %p42 = scmp.ne.s32.totalorder %s28, %s29
      %p43 = scmp.eq.s32.totalorder %s21, 1
      %p44 = por %p42, %p43
      %p46 = scmp.ne.s32.totalorder %s29, %s45
      %p47 = scmp.eq.s32.totalorder %s21, 0
      %p48 = por %p46, %p47
      %s49 = ssub.s32 %s15, %s22
      %p50 = scmp.eq.s32.totalorder %s49, 0
      %s52 = sadd.s32 %s51, 1
      %s53 = scalar_select %p50, %s51, %s52
      %p56 = pneg %p50
      %p57 = scmp.eq.s32.totalorder %s15, 1
      %p58 = por %p56, %p57
      %p59 = scmp.ne.s32.totalorder %s51, %s54
      %p60 = scmp.eq.s32.totalorder %s15, 0
      %p61 = por %p59, %p60
      %p62 = scmp.ne.s32.totalorder %s51, %s54
      %p63 = scmp.eq.s32.totalorder %s20, 1
      %p64 = por %p62, %p63
      %p65 = scmp.ne.s32.totalorder %s54, %s55
      %p66 = scmp.eq.s32.totalorder %s20, 0
      %p67 = por %p65, %p66
      %p68 = scmp.ne.s32.totalorder %s54, %s55
      %p69 = scmp.eq.s32.totalorder %s21, 1
      %p70 = por %p68, %p69
      %p72 = scmp.ne.s32.totalorder %s55, %s71
      %p73 = scmp.eq.s32.totalorder %s21, 0
      %p74 = por %p72, %p73
      %s75 = ssub.s32 %s15, %s22
      %p76 = scmp.eq.s32.totalorder %s75, 0
      %s78 = sadd.s32 %s77, 1
      %s79 = scalar_select %p76, %s77, %s78
      %p82 = pneg %p76
      %p83 = scmp.eq.s32.totalorder %s15, 1
      %p84 = por %p82, %p83
      %p85 = scmp.ne.s32.totalorder %s77, %s80
      %p86 = scmp.eq.s32.totalorder %s15, 0
      %p87 = por %p85, %p86
      %p88 = scmp.ne.s32.totalorder %s77, %s80
      %p89 = scmp.eq.s32.totalorder %s20, 1
      %p90 = por %p88, %p89
      %p91 = scmp.ne.s32.totalorder %s80, %s81
      %p92 = scmp.eq.s32.totalorder %s20, 0
      %p93 = por %p91, %p92
      %p94 = scmp.ne.s32.totalorder %s80, %s81
      %p95 = scmp.eq.s32.totalorder %s21, 1
      %p96 = por %p94, %p95
      %p98 = scmp.ne.s32.totalorder %s81, %s97
      %p99 = scmp.eq.s32.totalorder %s21, 0
      %p100 = por %p98, %p99
      %s101 = ssub.s32 %s15, %s22
      %p102 = scmp.eq.s32.totalorder %s101, 0
      %s104 = sadd.s32 %s103, 1
      %s105 = scalar_select %p102, %s103, %s104
      %p108 = pneg %p102
      %p109 = scmp.eq.s32.totalorder %s15, 1
      %p110 = por %p108, %p109
      %p111 = scmp.ne.s32.totalorder %s103, %s106
      %p112 = scmp.eq.s32.totalorder %s15, 0
      %p113 = por %p111, %p112
      %p114 = scmp.ne.s32.totalorder %s103, %s106
      %p115 = scmp.eq.s32.totalorder %s20, 1
      %p116 = por %p114, %p115
      %p117 = scmp.ne.s32.totalorder %s106, %s107
      %p118 = scmp.eq.s32.totalorder %s20, 0
      %p119 = por %p117, %p118
      %p120 = scmp.ne.s32.totalorder %s106, %s107
      %p121 = scmp.eq.s32.totalorder %s21, 1
      %p122 = por %p120, %p121
      %p124 = scmp.ne.s32.totalorder %s107, %s123
      %p125 = scmp.eq.s32.totalorder %s21, 0
      %p126 = por %p124, %p125
      %p127 = scmp.le.s32.totalorder 1, %s15
      %p128 = scmp.lt.s32.totalorder %s15, 3
      %p129 = pnand %p127, %p128
      %p130 = pneg %p129
      // Predicated region
      $region9: #{tpu_custom_call.1} parent=5 // pred_check
        _
      $region10: #{tpu_custom_call.1} parent=5 // pred_check_branch
        %132 = sbr.rel (%p129) target = $region12
      $region11: #{tpu_custom_call.1} parent=5 // pred_region
        %s133 = ssub.s32 %s15, 1
      $region12: #{tpu_custom_call.1} parent=5 // pred_fallthru
        _
      %p134 = scmp.lt.s32.totalorder %s15, 2
      // Predicated region
      $region13: #{tpu_custom_call.1} parent=5 // pred_check
        %p135 = pneg %p134
      $region14: #{tpu_custom_call.1} parent=5 // pred_check_branch
        %137 = sbr.rel (%p135) target = $region16
      $region15: #{tpu_custom_call.1} parent=5 // pred_region
        // Predicated region
        $region17: #{tpu_custom_call.1} parent=15 // pred_check
          %p138 = pneg %p35
        $region18: #{tpu_custom_call.1} parent=15 // pred_check_branch
          %140 = sbr.rel (%p138) target = $region20
        $region19: #{tpu_custom_call.1} parent=15 // pred_region
          %s141 = sand.u32 %s25, 1
          %s142 = scalar_lea.sflag [#allocation3], %s141
          %s143 = sand.u32 %s25, 1
          %s144 = smul.addr %s143, 16
          %s145 = scalar_lea.vmem [#allocation2], %s144
          %s146 = smul.u32 2, %s15
          %148 = vsyncadd %s142, 0
          %s149 = smul.addr %s146, 8
          %s150 = scalar_lea.hbm %s0, %s149
          %s151 = sshll.u32 %s150, 4
          %s152 = int_to_ptr.hbm [resolvable:$true] %s151
          %s153 = sshll.u32 %s145, 4
          %s154 = int_to_ptr.vmem [resolvable:$true] %s153
          %159 = dma.hbm_to_vmem [thread:$0]  %s152, 256, %s154, %s142, 128, 128, 8
        $region20: #{tpu_custom_call.1} parent=15 // pred_fallthru
          _
        // Predicated region
        $region21: #{tpu_custom_call.1} parent=15 // pred_check
          %p160 = pneg %p61
        $region22: #{tpu_custom_call.1} parent=15 // pred_check_branch
          %162 = sbr.rel (%p160) target = $region24
        $region23: #{tpu_custom_call.1} parent=15 // pred_region
          %s163 = sand.u32 %s15, 1
          %s164 = scalar_lea.sflag [#allocation5], %s163
          %s165 = sand.u32 %s51, 1
          %s166 = smul.addr %s165, 16
          %s167 = scalar_lea.vmem [#allocation4], %s166
          %s168 = smul.u32 2, %s15
          %170 = vsyncadd %s164, 0
          %s171 = smul.addr %s168, 8
          %s172 = scalar_lea.hbm %s1, %s171
          %s173 = sshll.u32 %s172, 4
          %s174 = int_to_ptr.hbm [resolvable:$true] %s173
          %s175 = sshll.u32 %s167, 4
          %s176 = int_to_ptr.vmem [resolvable:$true] %s175
          %181 = dma.hbm_to_vmem [thread:$0]  %s174, 256, %s176, %s164, 128, 128, 8
        $region24: #{tpu_custom_call.1} parent=15 // pred_fallthru
          _
        // Predicated region
        $region25: #{tpu_custom_call.1} parent=15 // pred_check
          %p182 = pneg %p87
        $region26: #{tpu_custom_call.1} parent=15 // pred_check_branch
          %184 = sbr.rel (%p182) target = $region28
        $region27: #{tpu_custom_call.1} parent=15 // pred_region
          %s185 = sand.u32 %s15, 1
          %s186 = scalar_lea.sflag [#allocation5], %s185
          %s187 = sand.u32 %s77, 1
          %s188 = smul.addr %s187, 16
          %s189 = scalar_lea.vmem [#allocation6], %s188
          %s190 = smul.u32 2, %s15
          %192 = vsyncadd %s186, 0
          %s193 = smul.addr %s190, 8
          %s194 = scalar_lea.hbm %s2, %s193
          %s195 = sshll.u32 %s194, 4
          %s196 = int_to_ptr.hbm [resolvable:$true] %s195
          %s197 = sshll.u32 %s189, 4
          %s198 = int_to_ptr.vmem [resolvable:$true] %s197
          %203 = dma.hbm_to_vmem [thread:$0]  %s196, 256, %s198, %s186, 128, 128, 8
        $region28: #{tpu_custom_call.1} parent=15 // pred_fallthru
          _
      $region16: #{tpu_custom_call.1} parent=5 // pred_fallthru
        _
      %p204 = scmp.le.s32.totalorder 1, %s15
      %p205 = scmp.lt.s32.totalorder %s15, 3
      %p206 = pnand %p204, %p205
      %p207 = pneg %p206
      // Predicated region
      $region29: #{tpu_custom_call.1} parent=5 // pred_check
        _
      $region30: #{tpu_custom_call.1} parent=5 // pred_check_branch
        %209 = sbr.rel (%p206) target = $region32
      $region31: #{tpu_custom_call.1} parent=5 // pred_region
        %s210 = ssub.s32 %s15, 1
        %s211 = sand.u32 %s28, 1
        %s212 = scalar_lea.sflag [#allocation3], %s211
        %s213 = sand.u32 %s28, 1
        %s214 = smul.addr %s213, 16
        %s215 = scalar_lea.vmem [#allocation2], %s214
        // Predicated region
        $region33: #{tpu_custom_call.1} parent=31 // pred_check
          %p216 = pneg %p41
        $region34: #{tpu_custom_call.1} parent=31 // pred_check_branch
          %218 = sbr.rel (%p216) target = $region36
        $region35: #{tpu_custom_call.1} parent=31 // pred_region
          %220 = dma.done %s212, 256
        $region36: #{tpu_custom_call.1} parent=31 // pred_fallthru
          _
        %s221 = sand.u32 %s20, 1
        %s222 = scalar_lea.sflag [#allocation5], %s221
        %s223 = sand.u32 %s54, 1
        %s224 = smul.addr %s223, 16
        %s225 = scalar_lea.vmem [#allocation4], %s224
        // Predicated region
        $region37: #{tpu_custom_call.1} parent=31 // pred_check
          %p226 = pneg %p67
        $region38: #{tpu_custom_call.1} parent=31 // pred_check_branch
          %228 = sbr.rel (%p226) target = $region40
        $region39: #{tpu_custom_call.1} parent=31 // pred_region
          %230 = dma.done %s222, 256
        $region40: #{tpu_custom_call.1} parent=31 // pred_fallthru
          _
        %s231 = sand.u32 %s20, 1
        %s232 = scalar_lea.sflag [#allocation5], %s231
        %s233 = sand.u32 %s80, 1
        %s234 = smul.addr %s233, 16
        %s235 = scalar_lea.vmem [#allocation6], %s234
        // Predicated region
        $region41: #{tpu_custom_call.1} parent=31 // pred_check
          %p236 = pneg %p93
        $region42: #{tpu_custom_call.1} parent=31 // pred_check_branch
          %238 = sbr.rel (%p236) target = $region44
        $region43: #{tpu_custom_call.1} parent=31 // pred_region
          %240 = dma.done %s232, 256
        $region44: #{tpu_custom_call.1} parent=31 // pred_fallthru
          _
        %s241 = sand.u32 %s28, 1
        %s242 = scalar_lea.sflag [#allocation3], %s241
        %s243 = sand.u32 %s28, 1
        %s244 = smul.addr %s243, 16
        %s245 = scalar_lea.vmem [#allocation2], %s244
        %p246 = pneg %p41
        %p247 = pneg %p38
        %s248 = sand.u32 %s20, 1
        %s249 = scalar_lea.sflag [#allocation5], %s248
        %s250 = sand.u32 %s54, 1
        %s251 = smul.addr %s250, 16
        %s252 = scalar_lea.vmem [#allocation4], %s251
        %p253 = pneg %p67
        %p254 = pneg %p64
        %s255 = sand.u32 %s20, 1
        %s256 = scalar_lea.sflag [#allocation5], %s255
        %s257 = sand.u32 %s80, 1
        %s258 = smul.addr %s257, 16
        %s259 = scalar_lea.vmem [#allocation6], %s258
        %p260 = pneg %p93
        %p261 = pneg %p90
        %p262 = pneg %p119
        %p263 = pneg %p116
        %s264 = smul.u32 2, %s20
        %p265 = scmp.lt.s32.totalorder %s264, 3
        %s266 = scalar_select %p265, %s264, 3
        %s267 = smul.addr %s266, 8
        %s268 = scalar_lea.vmem %s3, %s267
        %s269 = smul.u32 2, %s20
        %s270 = smul.u32 2, %s20
        %s271 = smul.u32 2, %s20
        %s272 = smul.u32 2, %s20
        %p273 = scmp.lt.s32.totalorder %s272, 3
        %s274 = scalar_select %p273, %s272, 3
        %s275 = smul.addr %s274, 8
        %s276 = scalar_lea.vmem %s3, %s275
        %s277 = smul.u32 2, %s20
        %v278 = vld [vmem:[%s215] sm:$0xff]
        %v279 = vld [vmem:[%s215 + $0x8] sm:$0xff]
        %v280 = vld [vmem:[%s225] sm:$0xff]
        %v281 = vld [vmem:[%s225 + $0x8] sm:$0xff]
        %v282 = vmul.f32 %v278, %v280
        %v283 = vmul.f32 %v279, %v281
        %v284 = vld [vmem:[%s235] sm:$0xff]
        %v285 = vld [vmem:[%s235 + $0x8] sm:$0xff]
        %v286 = vmul.f32 %v282, %v284
        %v287 = vmul.f32 %v283, %v285
        %vm288 = vcmask 261120
        %v289 = vsel %vm288, %v286, 0.0
        %290 = vadd.xlane.f32.xlu0 %v289
        %v291 = vpop.xlane.xlu0 %290
        %v292 = vsel %vm288, %v287, 0.0
        %293 = vadd.xlane.f32.xlu0 %v292
        %v294 = vpop.xlane.xlu0 %293
        %297 = vrot.lane.b32.xlu0 %v286, 96
        %v298 = vpop.permute.xlu0 %297
        %299 = vrot.lane.b32.xlu0 %v287, 96
        %v300 = vpop.permute.xlu0 %299
        %v303 = vsel %vm288, %v298, 0.0
        %304 = vadd.xlane.f32.xlu0 %v303
        %v305 = vpop.xlane.xlu0 %304
        %v306 = vsel %vm288, %v300, 0.0
        %307 = vadd.xlane.f32.xlu0 %v306
        %v308 = vpop.xlane.xlu0 %307
        %309 = vrot.lane.b32.xlu0 %v286, 64
        %v310 = vpop.permute.xlu0 %309
        %311 = vrot.lane.b32.xlu0 %v287, 64
        %v312 = vpop.permute.xlu0 %311
        %v315 = vsel %vm288, %v310, 0.0
        %316 = vadd.xlane.f32.xlu0 %v315
        %v317 = vpop.xlane.xlu0 %316
        %v318 = vsel %vm288, %v312, 0.0
        %319 = vadd.xlane.f32.xlu0 %v318
        %v320 = vpop.xlane.xlu0 %319
        %321 = vrot.lane.b32.xlu0 %v286, 32
        %v322 = vpop.permute.xlu0 %321
        %323 = vrot.lane.b32.xlu0 %v287, 32
        %v324 = vpop.permute.xlu0 %323
        %v327 = vsel %vm288, %v322, 0.0
        %328 = vadd.xlane.f32.xlu0 %v327
        %v329 = vpop.xlane.xlu0 %328
        %v330 = vsel %vm288, %v324, 0.0
        %331 = vadd.xlane.f32.xlu0 %v330
        %v332 = vpop.xlane.xlu0 %331
        %vm333 = vcmask 7168
        %v334 = vsel %vm333, %v291, %v305
        %v335 = vsel %vm333, %v294, %v308
        %vm336 = vcmask 15360
        %v337 = vsel %vm336, %v334, %v317
        %v338 = vsel %vm336, %v335, %v320
        %vm339 = vcmask 23552
        %v340 = vsel %vm339, %v337, %v329
        %v341 = vsel %vm339, %v338, %v332
        %vm342 = vcmask 31744
        %343 = vst.msk [vmem:[%s276] sm:$0xff] %vm342, %v340
        %344 = vst.msk [vmem:[%s276 + $0x8] sm:$0xff] %vm342, %v341
        %s345 = smul.u32 2, %s20
        %p346 = scmp.lt.s32.totalorder %s345, 3
        %s347 = scalar_select %p346, %s345, 3
        %s348 = smul.addr %s347, 8
        %s349 = scalar_lea.vmem %s3, %s348
        // Predicated region
        $region45: #{tpu_custom_call.1} parent=31 // pred_check
          %p350 = pneg %p116
        $region46: #{tpu_custom_call.1} parent=31 // pred_check_branch
          %352 = sbr.rel (%p350) target = $region48
        $region47: #{tpu_custom_call.1} parent=31 // pred_region
          %s353 = smul.u32 2, %s20
        $region48: #{tpu_custom_call.1} parent=31 // pred_fallthru
          _
      $region32: #{tpu_custom_call.1} parent=5 // pred_fallthru
        _
      %p354 = scmp.le.s32.totalorder 2, %s15
      // Predicated region
      $region49: #{tpu_custom_call.1} parent=5 // pred_check
        %p355 = pneg %p354
      $region50: #{tpu_custom_call.1} parent=5 // pred_check_branch
        %357 = sbr.rel (%p355) target = $region52
      $region51: #{tpu_custom_call.1} parent=5 // pred_region
        %s358 = ssub.s32 %s15, 2
        // Predicated region
        $region53: #{tpu_custom_call.1} parent=51 // pred_check
          %p359 = pneg %p122
        $region54: #{tpu_custom_call.1} parent=51 // pred_check_branch
          %361 = sbr.rel (%p359) target = $region56
        $region55: #{tpu_custom_call.1} parent=51 // pred_region
          %s362 = smul.u32 2, %s21
          %p363 = scmp.lt.s32.totalorder %s362, 3
          %s364 = scalar_select %p363, %s362, 3
          %s365 = smul.addr %s364, 8
          %s366 = scalar_lea.vmem %s3, %s365
        $region56: #{tpu_custom_call.1} parent=51 // pred_fallthru
          _
      $region52: #{tpu_custom_call.1} parent=5 // pred_fallthru
        _
    $region6: #{tpu_custom_call.1} parent=1 // loop_footer
      %s19 = sadd.s32 1, %s15
    $region7: #{tpu_custom_call.1} parent=1 // loop_footer_branch
      %14 = sbr.rel target = $region3
    $region8: #{tpu_custom_call.1} parent=1 // loop_exit
      _
    %367 = vsyncpa [#allocation3], 1
    %s368 = scalar_lea.sflag [#allocation3], 1
    %369 = vsyncpa %s368, 1
    %370 = vsyncpa [#allocation5], 1
    %s371 = scalar_lea.sflag [#allocation5], 1
    %372 = vsyncpa %s371, 1

</llo_original>
